<compile_context>
chip_gen: v7x
topology: tpu7x:2x2x1
jax: 0.10.0
libtpu: 0.0.40
codegen_flags: <defaults>
</compile_context>

<pallas_src>
import functools

import jax
import jax.numpy as jnp
from jax.experimental import pallas as pl
from jax.experimental.pallas import tpu as pltpu

LANE = 128        # padded weight N-dim (MXU lane width)
PARAM_ROWS = 144  # 128 weight rows + 1 bias row, padded to a multiple of 16 (bf16 sublane tile)
BIAS_ROW = 128    # row index of the bias inside each layer's packed slab


def _round_up(x, m):
    return (x + m - 1) // m * m


def _dqn_kernel(x_ref, p_ref, o_ref, *, k_rows, out_pad):
    """One batch tile of the 4-layer MLP.

    x_ref : (TB, in_pad)              f32/bf16 batch tile of inputs
    p_ref : (4, PARAM_ROWS, LANE)     bf16 packed [weights | bias] per layer (VMEM-resident)
    o_ref : (TB, out_pad)             f32 narrow output tile (out_pad = round_up(out_actions, 8))
    """
    h = x_ref[...].astype(jnp.bfloat16)            # no-op cast if x is already bf16
    n_layers = len(k_rows)
    for l in range(n_layers):                      # static unroll (4 layers)
        k = k_rows[l]                              # true contraction width, 16-aligned
        w = p_ref[l, 0:k, :]                       # (k, 128) bf16, static 16-aligned slice
        b = p_ref[l, BIAS_ROW:BIAS_ROW + 1, :].astype(jnp.float32)   # (1, 128)
        acc = jnp.dot(h[:, 0:k], w, preferred_element_type=jnp.float32) + b
        if l < n_layers - 1:
            h = jnp.maximum(acc, 0.0).astype(jnp.bfloat16)
        else:
            # No ReLU on the output layer; store only the narrow useful lanes.
            o_ref[...] = acc[:, 0:out_pad].astype(o_ref.dtype)


def pack_params(layers):
    """layers: list of (w (K, N) f32, b (N,) f32). Returns (L, PARAM_ROWS, LANE) bf16.

    Zero-padding to 128 lanes is mathematically identical (padded bias lanes and
    weight rows/cols are exact zeros, ReLU(0)=0), so the unpadded forward is preserved.
    """
    L = len(layers)
    P = jnp.zeros((L, PARAM_ROWS, LANE), jnp.float32)   # exact zeros outside [:K, :N]
    for l, (w, b) in enumerate(layers):
        K, N = w.shape
        assert K <= LANE and N <= LANE, "this kernel packs layers up to 128-wide"
        assert b.shape == (N,)
        P = P.at[l, :K, :N].set(w)
        P = P.at[l, BIAS_ROW, :N].set(b)
    return P.astype(jnp.bfloat16)


def _choose_batch_tiling(B, max_tb, split_threshold=512):
    """Pick (TB, B_pad): minimal batch padding, >=2 grid steps for large B (v7x megacore)."""
    n_tiles = -(-B // max_tb)
    if n_tiles < 2 and B >= split_threshold:
        n_tiles = 2                      # let ("parallel",) shard across v7x's 2 TCs
    TB = _round_up(-(-B // n_tiles), 8)
    B_pad = n_tiles * TB
    return TB, B_pad


def dqn_forward(x, packed, dims, *, max_tb=8192):
    """x: (B, in_states) f32 or bf16. packed: pack_params output.
    dims: [in_states, h1, h2, h3, out_actions]. Returns (B, out_actions) f32."""
    B, in_states = x.shape
    assert in_states == dims[0]
    out_actions = dims[-1]
    n_layers = packed.shape[0]
    assert n_layers == len(dims) - 1

    # Pad input feature dim to a multiple of 16 so the layer-0 weight-row slice
    # stays bf16-sublane aligned (block last dim == full array dim -> legal).
    in_pad = _round_up(in_states, 16)
    if in_pad != in_states:
        x = jnp.pad(x, ((0, 0), (0, in_pad - in_states)))

    TB, B_pad = _choose_batch_tiling(B, max_tb)
    if B_pad != B:
        x = jnp.pad(x, ((0, B_pad - B), (0, 0)))

    # True contraction widths per layer, rounded to the bf16 sublane tile (16);
    # the extra rows are exact zeros so results are unchanged.
    k_rows = (in_pad,) + tuple(_round_up(d, 16) for d in dims[1:-1])
    out_pad = _round_up(out_actions, 8)   # narrow output block (== full array last dim)

    # Real (unpadded) FLOPs for XLA's scheduler.
    flops = 2 * B_pad * sum(a * b for a, b in zip(dims[:-1], dims[1:]))
    bytes_accessed = (x.size * x.dtype.itemsize
                      + packed.size * packed.dtype.itemsize
                      + B_pad * out_pad * 4)

    out = pl.pallas_call(
        functools.partial(_dqn_kernel, k_rows=k_rows, out_pad=out_pad),
        out_shape=jax.ShapeDtypeStruct((B_pad, out_pad), jnp.float32),
        grid_spec=pltpu.PrefetchScalarGridSpec(
            num_scalar_prefetch=0,
            grid=(B_pad // TB,),
            in_specs=[
                pl.BlockSpec((TB, in_pad), lambda i: (i, 0)),
                # constant index_map -> parameters fetched once, stay VMEM-resident
                # (could also be pipeline_mode=pl.Buffered(1); buffer is only 144 KiB)
                pl.BlockSpec((n_layers, PARAM_ROWS, LANE), lambda i: (0, 0, 0)),
            ],
            out_specs=pl.BlockSpec((TB, out_pad), lambda i: (i, 0)),
        ),
        compiler_params=pltpu.CompilerParams(
            dimension_semantics=("parallel",)),   # v7x: shard batch tiles across both TCs
        cost_estimate=pl.CostEstimate(
            flops=flops, transcendentals=0, bytes_accessed=bytes_accessed),
    )(x, packed)

    # Slice only what was actually padded (these are separate XLA ops; avoid when no-op).
    if B_pad != B or out_pad != out_actions:
        out = out[:B, :out_actions]
    return out


def init_params(key, dims):
    """Deterministic PyTorch-Linear-like init. dims = [in, h1, h2, h3, out].
    Weights stored as (in, out) so the forward is x @ W + b (== PyTorch x @ W.T + b)."""
    layers = []
    keys = jax.random.split(key, len(dims) - 1)
    for k, fan_in, fan_out in zip(keys, dims[:-1], dims[1:]):
        kw, kb = jax.random.split(k)
        bound = 1.0 / jnp.sqrt(fan_in)
        w = jax.random.uniform(kw, (fan_in, fan_out), jnp.float32, -bound, bound)
        b = jax.random.uniform(kb, (fan_out,), jnp.float32, -bound, bound)
        layers.append((w, b))
    return layers


def dqn_reference_f32(x, layers):
    h = x
    for i, (w, b) in enumerate(layers):
        h = h @ w + b
        if i < len(layers) - 1:
            h = jnp.maximum(h, 0.0)
    return h


def dqn_reference_bf16(x, layers):
    """Numerically matches the kernel: bf16 operands, f32 accumulation."""
    h = x.astype(jnp.bfloat16)
    for i, (w, b) in enumerate(layers):
        acc = jnp.dot(h, w.astype(jnp.bfloat16), preferred_element_type=jnp.float32)
        acc = acc + b.astype(jnp.bfloat16).astype(jnp.float32)
        if i < len(layers) - 1:
            h = jnp.maximum(acc, 0.0).astype(jnp.bfloat16)
        else:
            return acc


if __name__ == "__main__":
    # Small shapes consistent with the module: batch=8, in_states=16,
    # h1=h2=h3=32, out_actions=4.
    key = jax.random.PRNGKey(0)
    kx, kp = jax.random.split(key)
    B, in_states, h1, h2, h3, out_actions = 8, 16, 32, 32, 32, 4
    dims = [in_states, h1, h2, h3, out_actions]

    x = jax.random.normal(kx, (B, in_states), jnp.float32)
    layers = init_params(kp, dims)
    packed = pack_params(layers)

    out = dqn_forward(x, packed, dims)
    out = jax.block_until_ready(out)

    assert out.shape == (B, out_actions)
    # Tight check vs a bf16-matched reference, loose check vs the pure-f32 forward.
    assert jnp.allclose(out, dqn_reference_bf16(x, layers), atol=5e-3, rtol=5e-3)
    assert jnp.allclose(out, dqn_reference_f32(x, layers), atol=5e-2, rtol=5e-2)
    print("KERNEL_OK")
</pallas_src>

<mosaic_0001>
module attributes {stable_mosaic.version = 11 : i64} {
  func.func @_dqn_kernel(%arg0: i32, %arg1: memref<8x16xf32, #tpu.memory_space<vmem>>, %arg2: memref<4x144x128xbf16, #tpu.memory_space<vmem>>, %arg3: memref<8x8xf32, #tpu.memory_space<vmem>>) attributes {dimension_semantics = [#tpu.dimension_semantics<parallel>], iteration_bounds = array<i64: 1>, scalar_prefetch = 0 : i64, scratch_operands = 0 : i64, tpu.core_type = #tpu.core_type<tc>, window_params = [{transform_indices = @transform_0, window_bounds = array<i64: 8, 16>}, {pipeline_mode = #tpu.pipeline_mode<synchronous>, transform_indices = @transform_1, window_bounds = array<i64: 4, 144, 128>}, {transform_indices = @transform_2, window_bounds = array<i64: 8, 8>}]} {
    %c0 = arith.constant 0 : index
    %c0_0 = arith.constant 0 : index
    %0 = vector.load %arg1[%c0, %c0_0] : memref<8x16xf32, #tpu.memory_space<vmem>>, vector<8x16xf32>
    %1 = arith.truncf %0 : vector<8x16xf32> to vector<8x16xbf16>
    %c0_1 = arith.constant 0 : index
    %c0_2 = arith.constant 0 : index
    %c0_3 = arith.constant 0 : index
    %2 = vector.load %arg2[%c0_1, %c0_2, %c0_3] : memref<4x144x128xbf16, #tpu.memory_space<vmem>>, vector<1x16x128xbf16>
    %3 = vector.shape_cast %2 : vector<1x16x128xbf16> to vector<16x128xbf16>
    %c0_4 = arith.constant 0 : index
    %c128 = arith.constant 128 : index
    %c0_5 = arith.constant 0 : index
    %4 = vector.load %arg2[%c0_4, %c128, %c0_5] : memref<4x144x128xbf16, #tpu.memory_space<vmem>>, vector<1x1x128xbf16>
    %5 = vector.shape_cast %4 : vector<1x1x128xbf16> to vector<1x128xbf16>
    %6 = arith.extf %5 : vector<1x128xbf16> to vector<1x128xf32>
    %cst = arith.constant dense<0.000000e+00> : vector<8x128xf32>
    %7 = tpu.matmul %1, %3, %cst {dimension_numbers = #tpu.dot_dimension_numbers<[1], [0], [0], [1], [0, 0, 1, 1], [], []>} : vector<8x16xbf16>, vector<16x128xbf16>, vector<8x128xf32> -> vector<8x128xf32>
    %8 = vector.broadcast %6 : vector<1x128xf32> to vector<8x128xf32>
    %9 = arith.addf %7, %8 : vector<8x128xf32>
    %cst_6 = arith.constant 0.000000e+00 : f32
    %10 = vector.broadcast %cst_6 : f32 to vector<8x128xf32>
    %11 = arith.maximumf %9, %10 : vector<8x128xf32>
    %12 = arith.truncf %11 : vector<8x128xf32> to vector<8x128xbf16>
    %c1 = arith.constant 1 : index
    %c0_7 = arith.constant 0 : index
    %c0_8 = arith.constant 0 : index
    %13 = vector.load %arg2[%c1, %c0_7, %c0_8] : memref<4x144x128xbf16, #tpu.memory_space<vmem>>, vector<1x32x128xbf16>
    %14 = vector.shape_cast %13 : vector<1x32x128xbf16> to vector<32x128xbf16>
    %c1_9 = arith.constant 1 : index
    %c128_10 = arith.constant 128 : index
    %c0_11 = arith.constant 0 : index
    %15 = vector.load %arg2[%c1_9, %c128_10, %c0_11] : memref<4x144x128xbf16, #tpu.memory_space<vmem>>, vector<1x1x128xbf16>
    %16 = vector.shape_cast %15 : vector<1x1x128xbf16> to vector<1x128xbf16>
    %17 = arith.extf %16 : vector<1x128xbf16> to vector<1x128xf32>
    %18 = vector.extract_strided_slice %12 {offsets = [0, 0], sizes = [8, 32], strides = [1, 1]} : vector<8x128xbf16> to vector<8x32xbf16>
    %cst_12 = arith.constant dense<0.000000e+00> : vector<8x128xf32>
    %19 = tpu.matmul %18, %14, %cst_12 {dimension_numbers = #tpu.dot_dimension_numbers<[1], [0], [0], [1], [0, 0, 1, 1], [], []>} : vector<8x32xbf16>, vector<32x128xbf16>, vector<8x128xf32> -> vector<8x128xf32>
    %20 = vector.broadcast %17 : vector<1x128xf32> to vector<8x128xf32>
    %21 = arith.addf %19, %20 : vector<8x128xf32>
    %cst_13 = arith.constant 0.000000e+00 : f32
    %22 = vector.broadcast %cst_13 : f32 to vector<8x128xf32>
    %23 = arith.maximumf %21, %22 : vector<8x128xf32>
    %24 = arith.truncf %23 : vector<8x128xf32> to vector<8x128xbf16>
    %c2 = arith.constant 2 : index
    %c0_14 = arith.constant 0 : index
    %c0_15 = arith.constant 0 : index
    %25 = vector.load %arg2[%c2, %c0_14, %c0_15] : memref<4x144x128xbf16, #tpu.memory_space<vmem>>, vector<1x32x128xbf16>
    %26 = vector.shape_cast %25 : vector<1x32x128xbf16> to vector<32x128xbf16>
    %c2_16 = arith.constant 2 : index
    %c128_17 = arith.constant 128 : index
    %c0_18 = arith.constant 0 : index
    %27 = vector.load %arg2[%c2_16, %c128_17, %c0_18] : memref<4x144x128xbf16, #tpu.memory_space<vmem>>, vector<1x1x128xbf16>
    %28 = vector.shape_cast %27 : vector<1x1x128xbf16> to vector<1x128xbf16>
    %29 = arith.extf %28 : vector<1x128xbf16> to vector<1x128xf32>
    %30 = vector.extract_strided_slice %24 {offsets = [0, 0], sizes = [8, 32], strides = [1, 1]} : vector<8x128xbf16> to vector<8x32xbf16>
    %cst_19 = arith.constant dense<0.000000e+00> : vector<8x128xf32>
    %31 = tpu.matmul %30, %26, %cst_19 {dimension_numbers = #tpu.dot_dimension_numbers<[1], [0], [0], [1], [0, 0, 1, 1], [], []>} : vector<8x32xbf16>, vector<32x128xbf16>, vector<8x128xf32> -> vector<8x128xf32>
    %32 = vector.broadcast %29 : vector<1x128xf32> to vector<8x128xf32>
    %33 = arith.addf %31, %32 : vector<8x128xf32>
    %cst_20 = arith.constant 0.000000e+00 : f32
    %34 = vector.broadcast %cst_20 : f32 to vector<8x128xf32>
    %35 = arith.maximumf %33, %34 : vector<8x128xf32>
    %36 = arith.truncf %35 : vector<8x128xf32> to vector<8x128xbf16>
    %c3 = arith.constant 3 : index
    %c0_21 = arith.constant 0 : index
    %c0_22 = arith.constant 0 : index
    %37 = vector.load %arg2[%c3, %c0_21, %c0_22] : memref<4x144x128xbf16, #tpu.memory_space<vmem>>, vector<1x32x128xbf16>
    %38 = vector.shape_cast %37 : vector<1x32x128xbf16> to vector<32x128xbf16>
    %c3_23 = arith.constant 3 : index
    %c128_24 = arith.constant 128 : index
    %c0_25 = arith.constant 0 : index
    %39 = vector.load %arg2[%c3_23, %c128_24, %c0_25] : memref<4x144x128xbf16, #tpu.memory_space<vmem>>, vector<1x1x128xbf16>
    %40 = vector.shape_cast %39 : vector<1x1x128xbf16> to vector<1x128xbf16>
    %41 = arith.extf %40 : vector<1x128xbf16> to vector<1x128xf32>
    %42 = vector.extract_strided_slice %36 {offsets = [0, 0], sizes = [8, 32], strides = [1, 1]} : vector<8x128xbf16> to vector<8x32xbf16>
    %cst_26 = arith.constant dense<0.000000e+00> : vector<8x128xf32>
    %43 = tpu.matmul %42, %38, %cst_26 {dimension_numbers = #tpu.dot_dimension_numbers<[1], [0], [0], [1], [0, 0, 1, 1], [], []>} : vector<8x32xbf16>, vector<32x128xbf16>, vector<8x128xf32> -> vector<8x128xf32>
    %44 = vector.broadcast %41 : vector<1x128xf32> to vector<8x128xf32>
    %45 = arith.addf %43, %44 : vector<8x128xf32>
    %46 = vector.extract_strided_slice %45 {offsets = [0, 0], sizes = [8, 8], strides = [1, 1]} : vector<8x128xf32> to vector<8x8xf32>
    %c0_27 = arith.constant 0 : index
    %c0_28 = arith.constant 0 : index
    %47 = vector.load %arg3[%c0_27, %c0_28] : memref<8x8xf32, #tpu.memory_space<vmem>>, vector<8x8xf32>
    tpu.vector_store %arg3[%c0_27, %c0_28], %46 {strides = array<i32>} : memref<8x8xf32, #tpu.memory_space<vmem>>, vector<8x8xf32>,
    return
  }
  func.func @transform_0(%arg0: i32) -> (i32, i32) {
    %c0_i32 = arith.constant 0 : i32
    %c0_i32_0 = arith.constant 0 : i32
    return %arg0, %c0_i32 : i32, i32
  }
  func.func @transform_1(%arg0: i32) -> (i32, i32, i32) {
    %c0_i32 = arith.constant 0 : i32
    %c0_i32_0 = arith.constant 0 : i32
    %c0_i32_1 = arith.constant 0 : i32
    %c0_i32_2 = arith.constant 0 : i32
    return %c0_i32, %c0_i32_0, %c0_i32_1 : i32, i32, i32
  }
  func.func @transform_2(%arg0: i32) -> (i32, i32) {
    %c0_i32 = arith.constant 0 : i32
    %c0_i32_0 = arith.constant 0 : i32
    return %arg0, %c0_i32 : i32, i32
  }
}

</mosaic_0001>

<llo_original>
// kernel: tpu_custom_call.1
$region0: #{tpu_custom_call.1}
  #allocation0 [shape = 'u32[]', space=smem, size = 0x4, offset = 0x4, fixed_abs, tag = 'smem constant byte address 0x4 - core index']
  #allocation1 [shape = 'u32[144,128]{1,0:T(1,128)}', space=vmem, size = 0x12000, scoped, tag = 'internal scratch']
  %s0 = inlined_call_operand.hbm [shape: f32[8,16], index: 0, kind: input, shape index: {}]
  %s1 = inlined_call_operand.hbm [shape: bf16[4,144,128], index: 1, kind: input, shape index: {}]
  %s2 = inlined_call_operand.hbm [shape: f32[8,8], index: 2, kind: output, shape index: {}]
  %s3 = sld [smem:[#allocation0]]
  $region26: #{tpu_custom_call.1} parent=0
    _
  %s5 = ssub.s32 1, %s3
  %s6 = scalar_select 0, %s5, %s3
  $region1: #{tpu_custom_call.1} parent=0
    #allocation2 [shape = 'u8[4096]{0}', space=vmem, size = 0x1000, scoped, tag = 'input window, operand 0, single buffered']
    #allocation3 [shape = 's32[1]{0}', space=sflag, size = 0x4, scoped, tag = 'scoped memory for tpu_custom_call.1']
    #allocation4 [shape = 's32[1]{0}', space=sflag, size = 0x4, scoped, tag = 'scoped memory for tpu_custom_call.1']
    #allocation5 [shape = 'u8[147456]{0}', space=vmem, size = 0x24000, scoped, tag = 'input window, operand 1, single buffered']
    #allocation6 [shape = 's32[1]{0}', space=sflag, size = 0x4, scoped, tag = 'scoped memory for tpu_custom_call.1']
    #allocation7 [shape = 'u8[4096]{0}', space=vmem, size = 0x1000, scoped, tag = 'output window, operand 0, single buffered']
    %7 = vsyncpa [#allocation3], 0
    %8 = vsyncpa [#allocation6], 0
    %9 = vsyncpa [#allocation4], 0
    // Predicated region
    $region2: #{tpu_custom_call.1} parent=1 // pred_check
      _
    $region3: #{tpu_custom_call.1} parent=1 // pred_check_branch
      %11 = sbr.rel (0) target = $region5
    $region4: #{tpu_custom_call.1} parent=1 // pred_region
      %s13 = ssub.s32 128, 128
      %14 = vsyncadd [#allocation3], %s13
      %s16 = sshll.u32 [#allocation2], 4
      %s17 = int_to_ptr.vmem [resolvable:$true] %s16
      %19 = dma.hbm_to_vmem [thread:$0]  %s0, 128, %s17, [#allocation3]
    $region5: #{tpu_custom_call.1} parent=1 // pred_fallthru
      _
    // Predicated region
    $region6: #{tpu_custom_call.1} parent=1 // pred_check
      _
    $region7: #{tpu_custom_call.1} parent=1 // pred_check_branch
      %21 = sbr.rel (0) target = $region9
    $region8: #{tpu_custom_call.1} parent=1 // pred_region
      %s23 = ssub.s32 4608, 4608
      %24 = vsyncadd [#allocation6], %s23
      %s25 = sshll.u32 [#allocation5], 4
      %s26 = int_to_ptr.vmem [resolvable:$true] %s25
      %31 = dma.hbm_to_vmem [thread:$0]  %s1, 4608, %s26, [#allocation6], 64, 64, 4
    $region9: #{tpu_custom_call.1} parent=1 // pred_fallthru
      _
    // Predicated region
    $region10: #{tpu_custom_call.1} parent=1 // pred_check
      _
    $region11: #{tpu_custom_call.1} parent=1 // pred_check_branch
      %33 = sbr.rel (0) target = $region13
    $region12: #{tpu_custom_call.1} parent=1 // pred_region
      %34 = dma.done [#allocation3], 128
    $region13: #{tpu_custom_call.1} parent=1 // pred_fallthru
      _
    // Predicated region
    $region14: #{tpu_custom_call.1} parent=1 // pred_check
      _
    $region15: #{tpu_custom_call.1} parent=1 // pred_check_branch
      %36 = sbr.rel (0) target = $region17
    $region16: #{tpu_custom_call.1} parent=1 // pred_region
      %37 = dma.done [#allocation6], 4608
    $region17: #{tpu_custom_call.1} parent=1 // pred_fallthru
      _
    %v39 = vld [vmem:[#allocation2] sm:$0xff]
    %v40 = vpack.c.bf16 %v39, %v39
    %v41 = vld [vmem:[#allocation5] sm:$0xf]
    %v42 = vld [vmem:[#allocation5 + $0x4] sm:$0xf]
    %v43 = vld [vmem:[#allocation5 + $0x40] sm:$0x1]
    %v44 = vunpack.c.l.bf16 %v43
    %v45 = vlaneseq
    %v46 = vshrl.u32 %v45, 7
    %v47 = vsub.s32 0, %v46
    %v48 = vrot.slane %v44, %v47
    %v51 = vunpack.c.l.b16 %v41
    %v52 = vunpack.c.l.b16 %v42
    %v53 = vpack.c.b16 %v52, %v51
    %vm55 = vcmask 130048
    %v57 = vsel %vm55, %v40, 0
    %59 = vmatprep.subr.bf16.mxu0 0
    %60 = vmatpush1.bf16.msra.mxu0 %v53
    %61 = vmatprep.subr.bf16.mxu0 0
    %62 = vmatpush1.bf16.msra.mxu0 0
    %63 = vmatprep.subr.bf16.mxu0 0
    %64 = vmatpush1.bf16.msra.mxu0 0
    %65 = vmatprep.subr.bf16.mxu0 0
    %66 = vmatpush1.bf16.msra.mxu0 0
    %67 = vmatprep.subr.bf16.mxu0 0
    %68 = vmatpush1.bf16.msra.mxu0 0
    %69 = vmatprep.subr.bf16.mxu0 0
    %70 = vmatpush1.bf16.msra.mxu0 0
    %71 = vmatprep.subr.bf16.mxu0 0
    %72 = vmatpush1.bf16.msra.mxu0 0
    %73 = vmatprep.subr.bf16.mxu0 0
    %74 = vmatpush1.bf16.msra.mxu0 0
    %75 = vmatprep.subr.bf16.mxu0 0
    %76 = vmatpush1.bf16.msra.mxu0 0
    %77 = vmatprep.subr.bf16.mxu0 0
    %78 = vmatpush1.bf16.msra.mxu0 0
    %79 = vmatprep.subr.bf16.mxu0 0
    %80 = vmatpush1.bf16.msra.mxu0 0
    %81 = vmatprep.subr.bf16.mxu0 0
    %82 = vmatpush1.bf16.msra.mxu0 0
    %83 = vmatprep.subr.bf16.mxu0 0
    %84 = vmatpush1.bf16.msra.mxu0 0
    %85 = vmatprep.subr.bf16.mxu0 0
    %86 = vmatpush1.bf16.msra.mxu0 0
    %87 = vmatprep.subr.bf16.mxu0 0
    %88 = vmatpush1.bf16.msra.mxu0 0
    %89 = vmatprep.subr.bf16.mxu0 0
    %90 = vmatpush1.bf16.msra.mxu0 0
    %91 = vmatprep.mubr.bf16.mxu0 0
    %92 = vmatmul.mubr.bf16.gmra.mrb[0].mxu0 %v57
    %v93 = vpop.f32.mrb[0].mxu0
    %v94 = vadd.f32 %v48, %v93
    %v95 = vpop.f32.mrb[0].mxu0
    %v96 = vpop.f32.mrb[0].mxu0
    %v97 = vpop.f32.mrb[0].mxu0
    %98 = vdwg.mxu0
    %v99 = vmax.f32 %v94, 0.0
    %v100 = vpack.c.bf16 %v99, %v99
    %s101 = scalar_lea.vmem [#allocation5], 72
    %v102 = vld [vmem:[%s101] sm:$0xf]
    %v103 = vld [vmem:[%s101 + $0x4] sm:$0xf]
    %v104 = vld [vmem:[%s101 + $0x8] sm:$0xf]
    %v105 = vld [vmem:[%s101 + $0xc] sm:$0xf]
    %v106 = vld [vmem:[%s101 + $0x40] sm:$0x1]
    %v107 = vunpack.c.l.bf16 %v106
    %v108 = vlaneseq
    %v109 = vshrl.u32 %v108, 7
    %v110 = vsub.s32 0, %v109
    %v111 = vrot.slane %v107, %v110
    %v116 = vunpack.c.l.b16 %v102
    %v117 = vunpack.c.l.b16 %v103
    %v118 = vunpack.c.l.b16 %v104
    %v119 = vunpack.c.l.b16 %v105
    %v120 = vpack.c.b16 %v117, %v116
    %v121 = vpack.c.b16 %v119, %v118
    %vm124 = vcmask 261120
    %v126 = vsel %vm124, %v100, 0
    %128 = vmatprep.subr.bf16.mxu0 0
    %129 = vmatpush1.bf16.msra.mxu0 %v120
    %130 = vmatprep.subr.bf16.mxu0 0
    %131 = vmatpush1.bf16.msra.mxu0 %v121
    %132 = vmatprep.subr.bf16.mxu0 0
    %133 = vmatpush1.bf16.msra.mxu0 0
    %134 = vmatprep.subr.bf16.mxu0 0
    %135 = vmatpush1.bf16.msra.mxu0 0
    %136 = vmatprep.subr.bf16.mxu0 0
    %137 = vmatpush1.bf16.msra.mxu0 0
    %138 = vmatprep.subr.bf16.mxu0 0
    %139 = vmatpush1.bf16.msra.mxu0 0
    %140 = vmatprep.subr.bf16.mxu0 0
    %141 = vmatpush1.bf16.msra.mxu0 0
    %142 = vmatprep.subr.bf16.mxu0 0
    %143 = vmatpush1.bf16.msra.mxu0 0
    %144 = vmatprep.subr.bf16.mxu0 0
    %145 = vmatpush1.bf16.msra.mxu0 0
    %146 = vmatprep.subr.bf16.mxu0 0
    %147 = vmatpush1.bf16.msra.mxu0 0
    %148 = vmatprep.subr.bf16.mxu0 0
    %149 = vmatpush1.bf16.msra.mxu0 0
    %150 = vmatprep.subr.bf16.mxu0 0
    %151 = vmatpush1.bf16.msra.mxu0 0
    %152 = vmatprep.subr.bf16.mxu0 0
    %153 = vmatpush1.bf16.msra.mxu0 0
    %154 = vmatprep.subr.bf16.mxu0 0
    %155 = vmatpush1.bf16.msra.mxu0 0
    %156 = vmatprep.subr.bf16.mxu0 0
    %157 = vmatpush1.bf16.msra.mxu0 0
    %158 = vmatprep.subr.bf16.mxu0 0
    %159 = vmatpush1.bf16.msra.mxu0 0
    %160 = vmatprep.mubr.bf16.mxu0 0
    %161 = vmatmul.mubr.bf16.gmra.mrb[0].mxu0 %v126
    %v162 = vpop.f32.mrb[0].mxu0
    %v163 = vadd.f32 %v111, %v162
    %v164 = vpop.f32.mrb[0].mxu0
    %v165 = vpop.f32.mrb[0].mxu0
    %v166 = vpop.f32.mrb[0].mxu0
    %167 = vdwg.mxu0
    %v168 = vmax.f32 %v163, 0.0
    %v169 = vpack.c.bf16 %v168, %v168
    %s170 = scalar_lea.vmem [#allocation5], 144
    %v171 = vld [vmem:[%s170] sm:$0xf]
    %v172 = vld [vmem:[%s170 + $0x4] sm:$0xf]
    %v173 = vld [vmem:[%s170 + $0x8] sm:$0xf]
    %v174 = vld [vmem:[%s170 + $0xc] sm:$0xf]
    %v175 = vld [vmem:[%s170 + $0x40] sm:$0x1]
    %v176 = vunpack.c.l.bf16 %v175
    %v177 = vlaneseq
    %v178 = vshrl.u32 %v177, 7
    %v179 = vsub.s32 0, %v178
    %v180 = vrot.slane %v176, %v179
    %v185 = vunpack.c.l.b16 %v171
    %v186 = vunpack.c.l.b16 %v172
    %v187 = vunpack.c.l.b16 %v173
    %v188 = vunpack.c.l.b16 %v174
    %v189 = vpack.c.b16 %v186, %v185
    %v190 = vpack.c.b16 %v188, %v187
    %v194 = vsel %vm124, %v169, 0
    %196 = vmatprep.subr.bf16.mxu0 0
    %197 = vmatpush1.bf16.msra.mxu0 %v189
    %198 = vmatprep.subr.bf16.mxu0 0
    %199 = vmatpush1.bf16.msra.mxu0 %v190
    %200 = vmatprep.subr.bf16.mxu0 0
    %201 = vmatpush1.bf16.msra.mxu0 0
    %202 = vmatprep.subr.bf16.mxu0 0
    %203 = vmatpush1.bf16.msra.mxu0 0
    %204 = vmatprep.subr.bf16.mxu0 0
    %205 = vmatpush1.bf16.msra.mxu0 0
    %206 = vmatprep.subr.bf16.mxu0 0
    %207 = vmatpush1.bf16.msra.mxu0 0
    %208 = vmatprep.subr.bf16.mxu0 0
    %209 = vmatpush1.bf16.msra.mxu0 0
    %210 = vmatprep.subr.bf16.mxu0 0
    %211 = vmatpush1.bf16.msra.mxu0 0
    %212 = vmatprep.subr.bf16.mxu0 0
    %213 = vmatpush1.bf16.msra.mxu0 0
    %214 = vmatprep.subr.bf16.mxu0 0
    %215 = vmatpush1.bf16.msra.mxu0 0
    %216 = vmatprep.subr.bf16.mxu0 0
    %217 = vmatpush1.bf16.msra.mxu0 0
    %218 = vmatprep.subr.bf16.mxu0 0
    %219 = vmatpush1.bf16.msra.mxu0 0
    %220 = vmatprep.subr.bf16.mxu0 0
    %221 = vmatpush1.bf16.msra.mxu0 0
    %222 = vmatprep.subr.bf16.mxu0 0
    %223 = vmatpush1.bf16.msra.mxu0 0
    %224 = vmatprep.subr.bf16.mxu0 0
    %225 = vmatpush1.bf16.msra.mxu0 0
    %226 = vmatprep.subr.bf16.mxu0 0
    %227 = vmatpush1.bf16.msra.mxu0 0
    %228 = vmatprep.mubr.bf16.mxu0 0
    %229 = vmatmul.mubr.bf16.gmra.mrb[0].mxu0 %v194
    %v230 = vpop.f32.mrb[0].mxu0
    %v231 = vadd.f32 %v180, %v230
    %v232 = vpop.f32.mrb[0].mxu0
    %v233 = vpop.f32.mrb[0].mxu0
    %v234 = vpop.f32.mrb[0].mxu0
    %235 = vdwg.mxu0
    %v236 = vmax.f32 %v231, 0.0
    %v237 = vpack.c.bf16 %v236, %v236
    %s238 = scalar_lea.vmem [#allocation5], 216
    %v239 = vld [vmem:[%s238] sm:$0xf]
    %v240 = vld [vmem:[%s238 + $0x4] sm:$0xf]
    %v241 = vld [vmem:[%s238 + $0x8] sm:$0xf]
    %v242 = vld [vmem:[%s238 + $0xc] sm:$0xf]
    %v243 = vld [vmem:[%s238 + $0x40] sm:$0x1]
    %v244 = vunpack.c.l.bf16 %v243
    %v245 = vlaneseq
    %v246 = vshrl.u32 %v245, 7
    %v247 = vsub.s32 0, %v246
    %v248 = vrot.slane %v244, %v247
    %v253 = vunpack.c.l.b16 %v239
    %v254 = vunpack.c.l.b16 %v240
    %v255 = vunpack.c.l.b16 %v241
    %v256 = vunpack.c.l.b16 %v242
    %v257 = vpack.c.b16 %v254, %v253
    %v258 = vpack.c.b16 %v256, %v255
    %v262 = vsel %vm124, %v237, 0
    %264 = vmatprep.subr.bf16.mxu0 0
    %265 = vmatpush1.bf16.msra.mxu0 %v257
    %266 = vmatprep.subr.bf16.mxu0 0
    %267 = vmatpush1.bf16.msra.mxu0 %v258
    %268 = vmatprep.subr.bf16.mxu0 0
    %269 = vmatpush1.bf16.msra.mxu0 0
    %270 = vmatprep.subr.bf16.mxu0 0
    %271 = vmatpush1.bf16.msra.mxu0 0
    %272 = vmatprep.subr.bf16.mxu0 0
    %273 = vmatpush1.bf16.msra.mxu0 0
    %274 = vmatprep.subr.bf16.mxu0 0
    %275 = vmatpush1.bf16.msra.mxu0 0
    %276 = vmatprep.subr.bf16.mxu0 0
    %277 = vmatpush1.bf16.msra.mxu0 0
    %278 = vmatprep.subr.bf16.mxu0 0
    %279 = vmatpush1.bf16.msra.mxu0 0
    %280 = vmatprep.subr.bf16.mxu0 0
    %281 = vmatpush1.bf16.msra.mxu0 0
    %282 = vmatprep.subr.bf16.mxu0 0
    %283 = vmatpush1.bf16.msra.mxu0 0
    %284 = vmatprep.subr.bf16.mxu0 0
    %285 = vmatpush1.bf16.msra.mxu0 0
    %286 = vmatprep.subr.bf16.mxu0 0
    %287 = vmatpush1.bf16.msra.mxu0 0
    %288 = vmatprep.subr.bf16.mxu0 0
    %289 = vmatpush1.bf16.msra.mxu0 0
    %290 = vmatprep.subr.bf16.mxu0 0
    %291 = vmatpush1.bf16.msra.mxu0 0
    %292 = vmatprep.subr.bf16.mxu0 0
    %293 = vmatpush1.bf16.msra.mxu0 0
    %294 = vmatprep.subr.bf16.mxu0 0
    %295 = vmatpush1.bf16.msra.mxu0 0
    %296 = vmatprep.mubr.bf16.mxu0 0
    %297 = vmatmul.mubr.bf16.gmra.mrb[0].mxu0 %v262
    %v298 = vpop.f32.mrb[0].mxu0
    %v299 = vadd.f32 %v248, %v298
    %v300 = vpop.f32.mrb[0].mxu0
    %v301 = vpop.f32.mrb[0].mxu0
    %v302 = vpop.f32.mrb[0].mxu0
    %303 = vdwg.mxu0
    %vm304 = vcmask 64512
    %305 = vst.msk [vmem:[#allocation7] sm:$0xff] %vm304, %v299
    // Predicated region
    $region18: #{tpu_custom_call.1} parent=1 // pred_check
      _
    $region19: #{tpu_custom_call.1} parent=1 // pred_check_branch
      %307 = sbr.rel (0) target = $region21
    $region20: #{tpu_custom_call.1} parent=1 // pred_region
      %s309 = ssub.s32 128, 128
      %310 = vsyncadd [#allocation4], %s309
      %s312 = sshll.u32 [#allocation7], 4
      %s313 = int_to_ptr.vmem [resolvable:$true] %s312
      %315 = dma.vmem_to_hbm [thread:$0]  %s313, 128, %s2, [#allocation4]
    $region21: #{tpu_custom_call.1} parent=1 // pred_fallthru
      _
    // Predicated region
    $region22: #{tpu_custom_call.1} parent=1 // pred_check
      _
    $region23: #{tpu_custom_call.1} parent=1 // pred_check_branch
      %317 = sbr.rel (0) target = $region25
    $region24: #{tpu_custom_call.1} parent=1 // pred_region
      %318 = dma.done [#allocation4], 128
    $region25: #{tpu_custom_call.1} parent=1 // pred_fallthru
      _
    %319 = vsyncpa [#allocation3], 1
    %320 = vsyncpa [#allocation6], 1
    %321 = vsyncpa [#allocation4], 1

</llo_original>
